<compile_context>
chip_gen: v7x
topology: tpu7x:2x2x1
jax: 0.10.0
libtpu: 0.0.40
codegen_flags: <defaults>
</compile_context>

<pallas_src>
import functools

import jax
import jax.numpy as jnp
from jax.experimental import pallas as pl
from jax.experimental.pallas import tpu as pltpu

IN_F = 20
H1 = 256            # net1 hidden
H2 = 128            # net2 hidden
OUT1 = 10           # net1 output
OUT2 = 5            # net2 output
H_CAT = H1 + H2     # 384 = 3 * 128 (MXU friendly on all generations)
OUT_CAT = OUT1 + OUT2          # 15
OUT_PAD = 16                   # narrow padded output (review item #2)
MAX_TB = 512                   # batch tile cap (multiple of 8 sublanes, VMEM-safe on v7x)


def _parallel_block_kernel(x_ref, w1_ref, b1_ref, w2_ref, b2_ref, o_ref):
    """Fused: x @ [W1a|W1b] + b1 -> ReLU -> @ blockdiag(W2a, W2b) + b2.

    Dots take bf16 operands (native MXU dtype on v5e/v6e/v7x) and accumulate in
    f32; bias add / ReLU are f32 on the VPU.
    """
    x = x_ref[...].astype(jnp.bfloat16)
    h = jnp.dot(x, w1_ref[...], preferred_element_type=jnp.float32) + b1_ref[...]
    h = jnp.maximum(h, 0.0)
    y = jnp.dot(h.astype(jnp.bfloat16), w2_ref[...],
                preferred_element_type=jnp.float32) + b2_ref[...]
    o_ref[...] = y.astype(o_ref.dtype)


def pack_parallel_block_params(params1, params2):
    """One-time packing of the two MLPs into fused layer-1 / block-diag layer-2 mats.

    Call this ONCE at model-init time (review item #1); the per-forward path only
    consumes the packed arrays.  Weights are stored (in_features, out_features),
    so the kernel computes y = x @ W + b directly.  Weight matrices are bf16
    (MXU input dtype); biases stay f32.
    """
    w11, b11, w12, b12 = params1   # (20,256), (1,256), (256,10), (1,10)
    w21, b21, w22, b22 = params2   # (20,128), (1,128), (128,5),  (1,5)

    # Layer 1: concatenate along the output dim -> one (20, 384) dot.
    W1 = jnp.concatenate([w11, w21], axis=1).astype(jnp.bfloat16)   # (20, 384)
    B1 = jnp.concatenate([b11, b21], axis=1).astype(jnp.float32)    # (1, 384)

    # Layer 2: block-diagonal, padded only to 16 output lanes (cols [0:15] are
    # exactly cat(net1, net2); col 15 is zero).
    W2 = jnp.zeros((H_CAT, OUT_PAD), dtype=jnp.float32)
    W2 = W2.at[:H1, :OUT1].set(w12)
    W2 = W2.at[H1:, OUT1:OUT_CAT].set(w22)
    W2 = W2.astype(jnp.bfloat16)                                     # (384, 16)
    B2 = jnp.zeros((1, OUT_PAD), dtype=jnp.float32)
    B2 = B2.at[:, :OUT1].set(b12)
    B2 = B2.at[:, OUT1:OUT_CAT].set(b22)
    return W1, B1, W2, B2


@jax.jit
def parallel_block_forward(x, W1, B1, W2, B2):
    """ParallelBlock.forward: cat(net1(x), net2(x), dim=1) — one pallas_call.

    Takes the already-packed parameters from pack_parallel_block_params().
    """
    B = x.shape[0]

    # Batch tile: full batch when small (block == full dim satisfies the (8,128)
    # rule), else 512 rows (multiple of 8 sublanes).  Weights stay resident.
    tb = B if B <= MAX_TB else MAX_TB
    grid = (pl.cdiv(B, tb),)

    def resident(shape):
        # Same block every grid step -> weight/bias stays in VMEM, no re-DMA.
        return pl.BlockSpec(shape, lambda i: (0,) * len(shape))

    # Advisory cost estimate (updated for the narrowed bf16 W2).
    flops = 2 * B * (IN_F * H_CAT + H_CAT * OUT_PAD) + 2 * B * (H_CAT + OUT_PAD)
    bytes_accessed = (4 * (x.size + B1.size + B2.size + B * OUT_PAD)
                      + 2 * (W1.size + W2.size))
    cost = pl.CostEstimate(flops=flops, transcendentals=0,
                           bytes_accessed=bytes_accessed)

    out_padded = pl.pallas_call(
        _parallel_block_kernel,
        out_shape=jax.ShapeDtypeStruct((B, OUT_PAD), jnp.float32),
        grid=grid,
        in_specs=[
            pl.BlockSpec((tb, IN_F), lambda i: (i, 0)),   # streamed x tiles
            resident(W1.shape),
            resident(B1.shape),
            resident(W2.shape),
            resident(B2.shape),
        ],
        out_specs=pl.BlockSpec((tb, OUT_PAD), lambda i: (i, 0)),
        compiler_params=pltpu.CompilerParams(
            # Batch axis is independent -> shard across v7x's 2 TensorCores;
            # harmless no-op on v5e/v6e.
            dimension_semantics=("parallel",)),
        cost_estimate=cost,
    )(x, W1, B1, W2, B2)

    # Drop the single padding column: [:, :15] is exactly cat(net1(x), net2(x)).
    return out_padded[:, :OUT_CAT]


def _init_linear(key, in_f, out_f):
    """Deterministic synthetic init. Weight stored as (in_f, out_f) = W^T."""
    kw, kb = jax.random.split(key)
    w = jax.random.normal(kw, (in_f, out_f), dtype=jnp.float32) * 0.02
    b = jax.random.normal(kb, (1, out_f), dtype=jnp.float32) * 0.02
    return w, b


if __name__ == "__main__":
    key = jax.random.PRNGKey(0)
    k_x, k11, k12, k21, k22 = jax.random.split(key, 5)

    # net1: Linear(20, 256) -> ReLU -> Linear(256, 10)
    w11, b11 = _init_linear(k11, IN_F, H1)
    w12, b12 = _init_linear(k12, H1, OUT1)
    params1 = (w11, b11, w12, b12)

    # net2: Linear(20, 128) -> ReLU -> Linear(128, 5)
    w21, b21 = _init_linear(k21, IN_F, H2)
    w22, b22 = _init_linear(k22, H2, OUT2)
    params2 = (w21, b21, w22, b22)

    # One-time packing at "model init" (not in the forward path).
    packed = pack_parallel_block_params(params1, params2)
    packed = jax.block_until_ready(packed)

    # x = torch.randn(2, 20) analogue.
    # TODO(synk): if evaluating many small inputs, stack them into one call with
    # B a multiple of 8 (ideally 128-1024) to amortize the fixed launch/DMA cost.
    x = jax.random.normal(k_x, (2, IN_F), dtype=jnp.float32)

    out = parallel_block_forward(x, *packed)
    out = jax.block_until_ready(out)

    # Plain-JAX f32 reference; tolerance loosened because the kernel's MXU
    # operands are bf16 (accumulation still f32).
    def ref_mlp(x, w1, b1, w2, b2):
        return jnp.maximum(x @ w1 + b1, 0.0) @ w2 + b2

    ref = jnp.concatenate([ref_mlp(x, *params1), ref_mlp(x, *params2)], axis=1)

    assert out.shape == (2, OUT_CAT), out.shape
    assert jnp.allclose(out, ref, atol=1e-2, rtol=1e-2), (
        float(jnp.max(jnp.abs(out - ref))))

    print("KERNEL_OK")
</pallas_src>

<mosaic_0001>
module attributes {stable_mosaic.version = 11 : i64} {
  func.func @_parallel_block_kernel(%arg0: i32, %arg1: memref<2x20xf32, #tpu.memory_space<vmem>>, %arg2: memref<20x384xbf16, #tpu.memory_space<vmem>>, %arg3: memref<1x384xf32, #tpu.memory_space<vmem>>, %arg4: memref<384x16xbf16, #tpu.memory_space<vmem>>, %arg5: memref<1x16xf32, #tpu.memory_space<vmem>>, %arg6: memref<2x16xf32, #tpu.memory_space<vmem>>) attributes {dimension_semantics = [#tpu.dimension_semantics<parallel>], iteration_bounds = array<i64: 1>, scalar_prefetch = 0 : i64, scratch_operands = 0 : i64, tpu.core_type = #tpu.core_type<tc>, window_params = [{transform_indices = @transform_0, window_bounds = array<i64: 2, 20>}, {pipeline_mode = #tpu.pipeline_mode<synchronous>, transform_indices = @transform_1, window_bounds = array<i64: 20, 384>}, {pipeline_mode = #tpu.pipeline_mode<synchronous>, transform_indices = @transform_2, window_bounds = array<i64: 1, 384>}, {pipeline_mode = #tpu.pipeline_mode<synchronous>, transform_indices = @transform_3, window_bounds = array<i64: 384, 16>}, {pipeline_mode = #tpu.pipeline_mode<synchronous>, transform_indices = @transform_4, window_bounds = array<i64: 1, 16>}, {transform_indices = @transform_5, window_bounds = array<i64: 2, 16>}]} {
    %c0 = arith.constant 0 : index
    %c0_0 = arith.constant 0 : index
    %0 = vector.load %arg1[%c0, %c0_0] : memref<2x20xf32, #tpu.memory_space<vmem>>, vector<2x20xf32>
    %1 = arith.truncf %0 : vector<2x20xf32> to vector<2x20xbf16>
    %c0_1 = arith.constant 0 : index
    %c0_2 = arith.constant 0 : index
    %2 = vector.load %arg2[%c0_1, %c0_2] : memref<20x384xbf16, #tpu.memory_space<vmem>>, vector<20x384xbf16>
    %cst = arith.constant dense<0.000000e+00> : vector<2x384xf32>
    %3 = tpu.matmul %1, %2, %cst {dimension_numbers = #tpu.dot_dimension_numbers<[1], [0], [0], [1], [0, 0, 1, 1], [], []>} : vector<2x20xbf16>, vector<20x384xbf16>, vector<2x384xf32> -> vector<2x384xf32>
    %c0_3 = arith.constant 0 : index
    %c0_4 = arith.constant 0 : index
    %4 = vector.load %arg3[%c0_3, %c0_4] : memref<1x384xf32, #tpu.memory_space<vmem>>, vector<1x384xf32>
    %5 = vector.broadcast %4 : vector<1x384xf32> to vector<2x384xf32>
    %6 = arith.addf %3, %5 : vector<2x384xf32>
    %cst_5 = arith.constant 0.000000e+00 : f32
    %7 = vector.broadcast %cst_5 : f32 to vector<2x384xf32>
    %8 = arith.maximumf %6, %7 : vector<2x384xf32>
    %9 = arith.truncf %8 : vector<2x384xf32> to vector<2x384xbf16>
    %c0_6 = arith.constant 0 : index
    %c0_7 = arith.constant 0 : index
    %10 = vector.load %arg4[%c0_6, %c0_7] : memref<384x16xbf16, #tpu.memory_space<vmem>>, vector<384x16xbf16>
    %cst_8 = arith.constant dense<0.000000e+00> : vector<2x16xf32>
    %11 = tpu.matmul %9, %10, %cst_8 {dimension_numbers = #tpu.dot_dimension_numbers<[1], [0], [0], [1], [0, 0, 1, 1], [], []>} : vector<2x384xbf16>, vector<384x16xbf16>, vector<2x16xf32> -> vector<2x16xf32>
    %c0_9 = arith.constant 0 : index
    %c0_10 = arith.constant 0 : index
    %12 = vector.load %arg5[%c0_9, %c0_10] : memref<1x16xf32, #tpu.memory_space<vmem>>, vector<1x16xf32>
    %13 = vector.broadcast %12 : vector<1x16xf32> to vector<2x16xf32>
    %14 = arith.addf %11, %13 : vector<2x16xf32>
    %c0_11 = arith.constant 0 : index
    %c0_12 = arith.constant 0 : index
    %15 = vector.load %arg6[%c0_11, %c0_12] : memref<2x16xf32, #tpu.memory_space<vmem>>, vector<2x16xf32>
    tpu.vector_store %arg6[%c0_11, %c0_12], %14 {strides = array<i32>} : memref<2x16xf32, #tpu.memory_space<vmem>>, vector<2x16xf32>,
    return
  }
  func.func @transform_0(%arg0: i32) -> (i32, i32) {
    %c0_i32 = arith.constant 0 : i32
    %c0_i32_0 = arith.constant 0 : i32
    return %arg0, %c0_i32 : i32, i32
  }
  func.func @transform_1(%arg0: i32) -> (i32, i32) {
    %c0_i32 = arith.constant 0 : i32
    %c0_i32_0 = arith.constant 0 : i32
    %c0_i32_1 = arith.constant 0 : i32
    return %c0_i32, %c0_i32_0 : i32, i32
  }
  func.func @transform_2(%arg0: i32) -> (i32, i32) {
    %c0_i32 = arith.constant 0 : i32
    %c0_i32_0 = arith.constant 0 : i32
    %c0_i32_1 = arith.constant 0 : i32
    return %c0_i32, %c0_i32_0 : i32, i32
  }
  func.func @transform_3(%arg0: i32) -> (i32, i32) {
    %c0_i32 = arith.constant 0 : i32
    %c0_i32_0 = arith.constant 0 : i32
    %c0_i32_1 = arith.constant 0 : i32
    return %c0_i32, %c0_i32_0 : i32, i32
  }
  func.func @transform_4(%arg0: i32) -> (i32, i32) {
    %c0_i32 = arith.constant 0 : i32
    %c0_i32_0 = arith.constant 0 : i32
    %c0_i32_1 = arith.constant 0 : i32
    return %c0_i32, %c0_i32_0 : i32, i32
  }
  func.func @transform_5(%arg0: i32) -> (i32, i32) {
    %c0_i32 = arith.constant 0 : i32
    %c0_i32_0 = arith.constant 0 : i32
    return %arg0, %c0_i32 : i32, i32
  }
}

</mosaic_0001>

<llo_original>
// kernel: parallel_block_forward.1
$region0: #{parallel_block_forward.1}
  #allocation0 [shape = 'u32[]', space=smem, size = 0x4, offset = 0x4, fixed_abs, tag = 'smem constant byte address 0x4 - core index']
  #allocation1 [shape = 'u32[144,128]{1,0:T(1,128)}', space=vmem, size = 0x12000, scoped, tag = 'internal scratch']
  %s0 = inlined_call_operand.vmem [shape: f32[2,20], index: 0, kind: input, shape index: {}]
  %s1 = inlined_call_operand.vmem [shape: bf16[20,384], index: 1, kind: input, shape index: {}]
  %s2 = inlined_call_operand.vmem [shape: f32[1,384], index: 2, kind: input, shape index: {}]
  %s3 = inlined_call_operand.vmem [shape: bf16[384,16], index: 3, kind: input, shape index: {}]
  %s4 = inlined_call_operand.vmem [shape: f32[1,16], index: 4, kind: input, shape index: {}]
  %s5 = inlined_call_operand.hbm [shape: f32[2,16], index: 5, kind: output, shape index: {}]
  %s6 = sld [smem:[#allocation0]]
  $region30: #{parallel_block_forward.1} parent=0
    _
  %s8 = ssub.s32 1, %s6
  %s9 = scalar_select 0, %s8, %s6
  $region1: #{parallel_block_forward.1} parent=0
    #allocation2 [shape = 'u8[1024]{0}', space=vmem, size = 0x400, scoped, tag = 'output window, operand 0, single buffered']
    #allocation3 [shape = 's32[1]{0}', space=sflag, size = 0x4, scoped, tag = 'scoped memory for parallel_block_forward.1']
    %10 = vsyncpa [#allocation3], 0
    // Predicated region
    $region2: #{parallel_block_forward.1} parent=1 // pred_check
      _
    $region3: #{parallel_block_forward.1} parent=1 // pred_check_branch
      %12 = sbr.rel (0) target = $region5
    $region4: #{parallel_block_forward.1} parent=1 // pred_region
      _
    $region5: #{parallel_block_forward.1} parent=1 // pred_fallthru
      _
    // Predicated region
    $region6: #{parallel_block_forward.1} parent=1 // pred_check
      _
    $region7: #{parallel_block_forward.1} parent=1 // pred_check_branch
      %14 = sbr.rel (0) target = $region9
    $region8: #{parallel_block_forward.1} parent=1 // pred_region
      _
    $region9: #{parallel_block_forward.1} parent=1 // pred_fallthru
      _
    // Predicated region
    $region10: #{parallel_block_forward.1} parent=1 // pred_check
      _
    $region11: #{parallel_block_forward.1} parent=1 // pred_check_branch
      %16 = sbr.rel (0) target = $region13
    $region12: #{parallel_block_forward.1} parent=1 // pred_region
      _
    $region13: #{parallel_block_forward.1} parent=1 // pred_fallthru
      _
    // Predicated region
    $region14: #{parallel_block_forward.1} parent=1 // pred_check
      _
    $region15: #{parallel_block_forward.1} parent=1 // pred_check_branch
      %18 = sbr.rel (0) target = $region17
    $region16: #{parallel_block_forward.1} parent=1 // pred_region
      _
    $region17: #{parallel_block_forward.1} parent=1 // pred_fallthru
      _
    // Predicated region
    $region18: #{parallel_block_forward.1} parent=1 // pred_check
      _
    $region19: #{parallel_block_forward.1} parent=1 // pred_check_branch
      %20 = sbr.rel (0) target = $region21
    $region20: #{parallel_block_forward.1} parent=1 // pred_region
      _
    $region21: #{parallel_block_forward.1} parent=1 // pred_fallthru
      _
    %v22 = vld [vmem:[%s0] sm:$0x3]
    %v23 = vpack.c.bf16 %v22, %v22
    %v24 = vld [vmem:[%s1] sm:$0xff]
    %v25 = vld [vmem:[%s1 + $0x8] sm:$0xf]
    %v26 = vld [vmem:[%s1 + $0xc] sm:$0xff]
    %v27 = vld [vmem:[%s1 + $0x14] sm:$0xf]
    %v28 = vld [vmem:[%s1 + $0x18] sm:$0x33]
    %v29 = vld [vmem:[%s1 + $0x20] sm:$0x3]
    %v30 = vld [vmem:[%s2] sm:$0x7]
    %v32 = vlaneseq
    %v33 = vshrl.u32 %v32, 7
    %v34 = vsub.s32 0, %v33
    %v35 = vrot.slane %v30, %v34
    %v36 = vlaneseq
    %v37 = vshrl.u32 %v36, 7
    %v38 = vsub.s32 1, %v37
    %v39 = vrot.slane %v30, %v38
    %v40 = vlaneseq
    %v41 = vshrl.u32 %v40, 7
    %v42 = vsub.s32 2, %v41
    %v43 = vrot.slane %v30, %v42
    %v53 = vunpack.c.l.b16 %v24
    %v54 = vunpack.c.h.b16 %v24
    %v55 = vunpack.c.l.b16 %v25
    %v56 = vunpack.c.l.b16 %v26
    %v57 = vunpack.c.h.b16 %v26
    %v58 = vunpack.c.l.b16 %v27
    %v59 = vunpack.c.l.b16 %v28
    %v60 = vunpack.c.h.b16 %v28
    %v61 = vunpack.c.l.b16 %v29
    %v62 = vpack.c.b16 %v56, %v53
    %v63 = vpack.c.b16 %v57, %v54
    %v64 = vpack.c.b16 %v58, %v55
    %v65 = vpack.c.b16 %v59, %v59
    %v66 = vpack.c.b16 %v60, %v60
    %v67 = vpack.c.b16 %v61, %v61
    %vm71 = vcmask 162816
    %v73 = vsel %vm71, %v23, 0
    %vm75 = vcmask 1041408
    %v77 = vsel %vm75, %v65, 0
    %v80 = vsel %vm75, %v66, 0
    %v83 = vsel %vm75, %v67, 0
    %85 = vmatprep.subr.bf16.mxu0 %v63
    %86 = vmatpush1.bf16.msra.mxu0 %v62
    %87 = vmatprep.subr.bf16.mxu0 %v80
    %88 = vmatpush1.bf16.msra.mxu0 %v77
    %89 = vmatprep.subr.bf16.mxu0 0
    %90 = vmatpush1.bf16.msra.mxu0 0
    %91 = vmatprep.subr.bf16.mxu0 0
    %92 = vmatpush1.bf16.msra.mxu0 0
    %93 = vmatprep.subr.bf16.mxu0 0
    %94 = vmatpush1.bf16.msra.mxu0 0
    %95 = vmatprep.subr.bf16.mxu0 0
    %96 = vmatpush1.bf16.msra.mxu0 0
    %97 = vmatprep.subr.bf16.mxu0 0
    %98 = vmatpush1.bf16.msra.mxu0 0
    %99 = vmatprep.subr.bf16.mxu0 0
    %100 = vmatpush1.bf16.msra.mxu0 0
    %101 = vmatprep.subr.bf16.mxu0 0
    %102 = vmatpush1.bf16.msra.mxu0 0
    %103 = vmatprep.subr.bf16.mxu0 0
    %104 = vmatpush1.bf16.msra.mxu0 0
    %105 = vmatprep.subr.bf16.mxu0 0
    %106 = vmatpush1.bf16.msra.mxu0 0
    %107 = vmatprep.subr.bf16.mxu0 0
    %108 = vmatpush1.bf16.msra.mxu0 0
    %109 = vmatprep.subr.bf16.mxu0 0
    %110 = vmatpush1.bf16.msra.mxu0 0
    %111 = vmatprep.subr.bf16.mxu0 0
    %112 = vmatpush1.bf16.msra.mxu0 0
    %113 = vmatprep.subr.bf16.mxu0 0
    %114 = vmatpush1.bf16.msra.mxu0 0
    %115 = vmatprep.subr.bf16.mxu0 0
    %116 = vmatpush1.bf16.msra.mxu0 0
    %117 = vmatprep.mubr.bf16.mxu0 0
    %118 = vmatmul.mubr.bf16.gmra.mrb[0].mxu0 %v73
    %v119 = vpop.f32.mrb[0].mxu0
    %v120 = vadd.f32 %v35, %v119
    %v121 = vpop.f32.mrb[0].mxu0
    %v122 = vadd.f32 %v39, %v121
    %v123 = vpop.f32.mrb[0].mxu0
    %v124 = vpop.f32.mrb[0].mxu0
    %125 = vdwg.mxu0
    %126 = vmatprep.subr.bf16.mxu0 0
    %127 = vmatpush1.bf16.msra.mxu0 %v64
    %128 = vmatprep.subr.bf16.mxu0 0
    %129 = vmatpush1.bf16.msra.mxu0 %v83
    %130 = vmatprep.subr.bf16.mxu0 0
    %131 = vmatpush1.bf16.msra.mxu0 0
    %132 = vmatprep.subr.bf16.mxu0 0
    %133 = vmatpush1.bf16.msra.mxu0 0
    %134 = vmatprep.subr.bf16.mxu0 0
    %135 = vmatpush1.bf16.msra.mxu0 0
    %136 = vmatprep.subr.bf16.mxu0 0
    %137 = vmatpush1.bf16.msra.mxu0 0
    %138 = vmatprep.subr.bf16.mxu0 0
    %139 = vmatpush1.bf16.msra.mxu0 0
    %140 = vmatprep.subr.bf16.mxu0 0
    %141 = vmatpush1.bf16.msra.mxu0 0
    %142 = vmatprep.subr.bf16.mxu0 0
    %143 = vmatpush1.bf16.msra.mxu0 0
    %144 = vmatprep.subr.bf16.mxu0 0
    %145 = vmatpush1.bf16.msra.mxu0 0
    %146 = vmatprep.subr.bf16.mxu0 0
    %147 = vmatpush1.bf16.msra.mxu0 0
    %148 = vmatprep.subr.bf16.mxu0 0
    %149 = vmatpush1.bf16.msra.mxu0 0
    %150 = vmatprep.subr.bf16.mxu0 0
    %151 = vmatpush1.bf16.msra.mxu0 0
    %152 = vmatprep.subr.bf16.mxu0 0
    %153 = vmatpush1.bf16.msra.mxu0 0
    %154 = vmatprep.subr.bf16.mxu0 0
    %155 = vmatpush1.bf16.msra.mxu0 0
    %156 = vmatprep.subr.bf16.mxu0 0
    %157 = vmatpush1.bf16.msra.mxu0 0
    %158 = vmatprep.mubr.bf16.mxu0 0
    %159 = vmatmul.mubr.bf16.gmra.mrb[0].mxu0 %v73
    %v160 = vpop.f32.mrb[0].mxu0
    %v161 = vadd.f32 %v43, %v160
    %v162 = vpop.f32.mrb[0].mxu0
    %v163 = vpop.f32.mrb[0].mxu0
    %v164 = vpop.f32.mrb[0].mxu0
    %165 = vdwg.mxu0
    %v166 = vmax.f32 %v120, 0.0
    %v167 = vmax.f32 %v122, 0.0
    %v168 = vmax.f32 %v161, 0.0
    %v169 = vpack.c.bf16 %v166, %v166
    %v170 = vpack.c.bf16 %v167, %v167
    %v171 = vpack.c.bf16 %v168, %v168
    %v172 = vld [vmem:[%s3] sm:$0xf]
    %v173 = vld [vmem:[%s3 + $0x4] sm:$0xf]
    %v174 = vld [vmem:[%s3 + $0x8] sm:$0xf]
    %v175 = vld [vmem:[%s3 + $0xc] sm:$0xf]
    %v176 = vld [vmem:[%s3 + $0x10] sm:$0xf]
    %v177 = vld [vmem:[%s3 + $0x14] sm:$0xf]
    %v178 = vld [vmem:[%s3 + $0x18] sm:$0xf]
    %v179 = vld [vmem:[%s3 + $0x1c] sm:$0xf]
    %v180 = vld [vmem:[%s3 + $0x20] sm:$0xf]
    %v181 = vld [vmem:[%s3 + $0x24] sm:$0xf]
    %v182 = vld [vmem:[%s3 + $0x28] sm:$0xf]
    %v183 = vld [vmem:[%s3 + $0x2c] sm:$0xf]
    %v184 = vld [vmem:[%s3 + $0x30] sm:$0xf]
    %v185 = vld [vmem:[%s3 + $0x34] sm:$0xf]
    %v186 = vld [vmem:[%s3 + $0x38] sm:$0xf]
    %v187 = vld [vmem:[%s3 + $0x3c] sm:$0xf]
    %v188 = vld [vmem:[%s3 + $0x40] sm:$0xf]
    %v189 = vld [vmem:[%s3 + $0x44] sm:$0xf]
    %v190 = vld [vmem:[%s3 + $0x48] sm:$0xf]
    %v191 = vld [vmem:[%s3 + $0x4c] sm:$0xf]
    %v192 = vld [vmem:[%s3 + $0x50] sm:$0xf]
    %v193 = vld [vmem:[%s3 + $0x54] sm:$0xf]
    %v194 = vld [vmem:[%s3 + $0x58] sm:$0xf]
    %v195 = vld [vmem:[%s3 + $0x5c] sm:$0xf]
    %v196 = vld [vmem:[%s3 + $0x60] sm:$0xf]
    %v197 = vld [vmem:[%s3 + $0x64] sm:$0xf]
    %v198 = vld [vmem:[%s3 + $0x68] sm:$0xf]
    %v199 = vld [vmem:[%s3 + $0x6c] sm:$0xf]
    %v200 = vld [vmem:[%s3 + $0x70] sm:$0xf]
    %v201 = vld [vmem:[%s3 + $0x74] sm:$0xf]
    %v202 = vld [vmem:[%s3 + $0x78] sm:$0xf]
    %v203 = vld [vmem:[%s3 + $0x7c] sm:$0xf]
    %v204 = vld [vmem:[%s3 + $0x80] sm:$0xf]
    %v205 = vld [vmem:[%s3 + $0x84] sm:$0xf]
    %v206 = vld [vmem:[%s3 + $0x88] sm:$0xf]
    %v207 = vld [vmem:[%s3 + $0x8c] sm:$0xf]
    %v208 = vld [vmem:[%s3 + $0x90] sm:$0xf]
    %v209 = vld [vmem:[%s3 + $0x94] sm:$0xf]
    %v210 = vld [vmem:[%s3 + $0x98] sm:$0xf]
    %v211 = vld [vmem:[%s3 + $0x9c] sm:$0xf]
    %v212 = vld [vmem:[%s3 + $0xa0] sm:$0xf]
    %v213 = vld [vmem:[%s3 + $0xa4] sm:$0xf]
    %v214 = vld [vmem:[%s3 + $0xa8] sm:$0xf]
    %v215 = vld [vmem:[%s3 + $0xac] sm:$0xf]
    %v216 = vld [vmem:[%s3 + $0xb0] sm:$0xf]
    %v217 = vld [vmem:[%s3 + $0xb4] sm:$0xf]
    %v218 = vld [vmem:[%s3 + $0xb8] sm:$0xf]
    %v219 = vld [vmem:[%s3 + $0xbc] sm:$0xf]
    %v220 = vld [vmem:[%s4] sm:$0x1]
    %v222 = vlaneseq
    %v223 = vshrl.u32 %v222, 7
    %v224 = vsub.s32 0, %v223
    %v225 = vrot.slane %v220, %v224
    %v275 = vunpack.c.l.b16 %v172
    %v276 = vunpack.c.l.b16 %v173
    %v277 = vunpack.c.l.b16 %v174
    %v278 = vunpack.c.l.b16 %v175
    %v279 = vunpack.c.l.b16 %v176
    %v280 = vunpack.c.l.b16 %v177
    %v281 = vunpack.c.l.b16 %v178
    %v282 = vunpack.c.l.b16 %v179
    %v283 = vunpack.c.l.b16 %v180
    %v284 = vunpack.c.l.b16 %v181
    %v285 = vunpack.c.l.b16 %v182
    %v286 = vunpack.c.l.b16 %v183
    %v287 = vunpack.c.l.b16 %v184
    %v288 = vunpack.c.l.b16 %v185
    %v289 = vunpack.c.l.b16 %v186
    %v290 = vunpack.c.l.b16 %v187
    %v291 = vunpack.c.l.b16 %v188
    %v292 = vunpack.c.l.b16 %v189
    %v293 = vunpack.c.l.b16 %v190
    %v294 = vunpack.c.l.b16 %v191
    %v295 = vunpack.c.l.b16 %v192
    %v296 = vunpack.c.l.b16 %v193
    %v297 = vunpack.c.l.b16 %v194
    %v298 = vunpack.c.l.b16 %v195
    %v299 = vunpack.c.l.b16 %v196
    %v300 = vunpack.c.l.b16 %v197
    %v301 = vunpack.c.l.b16 %v198
    %v302 = vunpack.c.l.b16 %v199
    %v303 = vunpack.c.l.b16 %v200
    %v304 = vunpack.c.l.b16 %v201
    %v305 = vunpack.c.l.b16 %v202
    %v306 = vunpack.c.l.b16 %v203
    %v307 = vunpack.c.l.b16 %v204
    %v308 = vunpack.c.l.b16 %v205
    %v309 = vunpack.c.l.b16 %v206
    %v310 = vunpack.c.l.b16 %v207
    %v311 = vunpack.c.l.b16 %v208
    %v312 = vunpack.c.l.b16 %v209
    %v313 = vunpack.c.l.b16 %v210
    %v314 = vunpack.c.l.b16 %v211
    %v315 = vunpack.c.l.b16 %v212
    %v316 = vunpack.c.l.b16 %v213
    %v317 = vunpack.c.l.b16 %v214
    %v318 = vunpack.c.l.b16 %v215
    %v319 = vunpack.c.l.b16 %v216
    %v320 = vunpack.c.l.b16 %v217
    %v321 = vunpack.c.l.b16 %v218
    %v322 = vunpack.c.l.b16 %v219
    %v323 = vpack.c.b16 %v276, %v275
    %v324 = vpack.c.b16 %v278, %v277
    %v325 = vpack.c.b16 %v280, %v279
    %v326 = vpack.c.b16 %v282, %v281
    %v327 = vpack.c.b16 %v284, %v283
    %v328 = vpack.c.b16 %v286, %v285
    %v329 = vpack.c.b16 %v288, %v287
    %v330 = vpack.c.b16 %v290, %v289
    %v331 = vpack.c.b16 %v292, %v291
    %v332 = vpack.c.b16 %v294, %v293
    %v333 = vpack.c.b16 %v296, %v295
    %v334 = vpack.c.b16 %v298, %v297
    %v335 = vpack.c.b16 %v300, %v299
    %v336 = vpack.c.b16 %v302, %v301
    %v337 = vpack.c.b16 %v304, %v303
    %v338 = vpack.c.b16 %v306, %v305
    %v339 = vpack.c.b16 %v308, %v307
    %v340 = vpack.c.b16 %v310, %v309
    %v341 = vpack.c.b16 %v312, %v311
    %v342 = vpack.c.b16 %v314, %v313
    %v343 = vpack.c.b16 %v316, %v315
    %v344 = vpack.c.b16 %v318, %v317
    %v345 = vpack.c.b16 %v320, %v319
    %v346 = vpack.c.b16 %v322, %v321
    %371 = vmatprep.subr.bf16.mxu0 0
    %372 = vmatpush1.bf16.msra.mxu0 %v323
    %373 = vmatprep.subr.bf16.mxu0 0
    %374 = vmatpush1.bf16.msra.mxu0 %v324
    %375 = vmatprep.subr.bf16.mxu0 0
    %376 = vmatpush1.bf16.msra.mxu0 %v325
    %377 = vmatprep.subr.bf16.mxu0 0
    %378 = vmatpush1.bf16.msra.mxu0 %v326
    %379 = vmatprep.subr.bf16.mxu0 0
    %380 = vmatpush1.bf16.msra.mxu0 %v327
    %381 = vmatprep.subr.bf16.mxu0 0
    %382 = vmatpush1.bf16.msra.mxu0 %v328
    %383 = vmatprep.subr.bf16.mxu0 0
    %384 = vmatpush1.bf16.msra.mxu0 %v329
    %385 = vmatprep.subr.bf16.mxu0 0
    %386 = vmatpush1.bf16.msra.mxu0 %v330
    %387 = vmatprep.subr.bf16.mxu0 0
    %388 = vmatpush1.bf16.msra.mxu0 %v331
    %389 = vmatprep.subr.bf16.mxu0 0
    %390 = vmatpush1.bf16.msra.mxu0 %v332
    %391 = vmatprep.subr.bf16.mxu0 0
    %392 = vmatpush1.bf16.msra.mxu0 %v333
    %393 = vmatprep.subr.bf16.mxu0 0
    %394 = vmatpush1.bf16.msra.mxu0 %v334
    %395 = vmatprep.subr.bf16.mxu0 0
    %396 = vmatpush1.bf16.msra.mxu0 %v335
    %397 = vmatprep.subr.bf16.mxu0 0
    %398 = vmatpush1.bf16.msra.mxu0 %v336
    %399 = vmatprep.subr.bf16.mxu0 0
    %400 = vmatpush1.bf16.msra.mxu0 %v337
    %401 = vmatprep.subr.bf16.mxu0 0
    %402 = vmatpush1.bf16.msra.mxu0 %v338
    %403 = vmatprep.mubr.bf16.mxu0 %v170
    %404 = vmatmul.mubr.bf16.gmra.mrb[0].mxu0 %v169
    %v405 = vpop.f32.mrb[0].mxu0
    %v406 = vadd.f32 %v225, %v405
    %v407 = vpop.f32.mrb[0].mxu0
    %v408 = vpop.f32.mrb[0].mxu0
    %v409 = vpop.f32.mrb[0].mxu0
    %410 = vdwg.mxu0
    %411 = vmatprep.subr.bf16.mxu0 0
    %412 = vmatpush1.bf16.msra.mxu0 %v339
    %413 = vmatprep.subr.bf16.mxu0 0
    %414 = vmatpush1.bf16.msra.mxu0 %v340
    %415 = vmatprep.subr.bf16.mxu0 0
    %416 = vmatpush1.bf16.msra.mxu0 %v341
    %417 = vmatprep.subr.bf16.mxu0 0
    %418 = vmatpush1.bf16.msra.mxu0 %v342
    %419 = vmatprep.subr.bf16.mxu0 0
    %420 = vmatpush1.bf16.msra.mxu0 %v343
    %421 = vmatprep.subr.bf16.mxu0 0
    %422 = vmatpush1.bf16.msra.mxu0 %v344
    %423 = vmatprep.subr.bf16.mxu0 0
    %424 = vmatpush1.bf16.msra.mxu0 %v345
    %425 = vmatprep.subr.bf16.mxu0 0
    %426 = vmatpush1.bf16.msra.mxu0 %v346
    %427 = vmatprep.subr.bf16.mxu0 0
    %428 = vmatpush1.bf16.msra.mxu0 0
    %429 = vmatprep.subr.bf16.mxu0 0
    %430 = vmatpush1.bf16.msra.mxu0 0
    %431 = vmatprep.subr.bf16.mxu0 0
    %432 = vmatpush1.bf16.msra.mxu0 0
    %433 = vmatprep.subr.bf16.mxu0 0
    %434 = vmatpush1.bf16.msra.mxu0 0
    %435 = vmatprep.subr.bf16.mxu0 0
    %436 = vmatpush1.bf16.msra.mxu0 0
    %437 = vmatprep.subr.bf16.mxu0 0
    %438 = vmatpush1.bf16.msra.mxu0 0
    %439 = vmatprep.subr.bf16.mxu0 0
    %440 = vmatpush1.bf16.msra.mxu0 0
    %441 = vmatprep.subr.bf16.mxu0 0
    %442 = vmatpush1.bf16.msra.mxu0 0
    %443 = vmatprep.mubr.bf16.mxu0 0
    %444 = vmatmul.mubr.bf16.gmra.mrb[0].mxu0 %v171
    %v445 = vpop.f32.mrb[0].mxu0
    %v446 = vadd.f32 %v406, %v445
    %v447 = vpop.f32.mrb[0].mxu0
    %v448 = vpop.f32.mrb[0].mxu0
    %v449 = vpop.f32.mrb[0].mxu0
    %450 = vdwg.mxu0
    %vm451 = vcmask 123904
    %452 = vst.msk [vmem:[#allocation2] sm:$0x3] %vm451, %v446
    // Predicated region
    $region22: #{parallel_block_forward.1} parent=1 // pred_check
      _
    $region23: #{parallel_block_forward.1} parent=1 // pred_check_branch
      %454 = sbr.rel (0) target = $region25
    $region24: #{parallel_block_forward.1} parent=1 // pred_region
      %s456 = ssub.s32 32, 32
      %457 = vsyncadd [#allocation3], %s456
      %s459 = sshll.u32 [#allocation2], 4
      %s460 = int_to_ptr.vmem [resolvable:$true] %s459
      %462 = dma.vmem_to_hbm [thread:$0]  %s460, 32, %s5, [#allocation3]
    $region25: #{parallel_block_forward.1} parent=1 // pred_fallthru
      _
    // Predicated region
    $region26: #{parallel_block_forward.1} parent=1 // pred_check
      _
    $region27: #{parallel_block_forward.1} parent=1 // pred_check_branch
      %464 = sbr.rel (0) target = $region29
    $region28: #{parallel_block_forward.1} parent=1 // pred_region
      %465 = dma.done [#allocation3], 32
    $region29: #{parallel_block_forward.1} parent=1 // pred_fallthru
      _
    %466 = vsyncpa [#allocation3], 1

</llo_original>
